<compile_context>
chip_gen: v5e
topology: v5e:2x2
jax: 0.10.0
libtpu: 0.0.40
codegen_flags: <defaults>
</compile_context>

<pallas_src>
import jax
import jax.numpy as jnp
from jax.experimental import pallas as pl
from jax.experimental.pallas import tpu as pltpu

HIDDEN = 128
OUT_PAD = 128  # lane-dense output width (must be >= a_dim + 1)


def _a3c_net_kernel(x_ref, w1_ref, w2_ref, b2_ref, out_ref):
    # x_ref : [bm, s_dim+1]       (last column is ones -> folds in layer-1 bias)
    # w1_ref: [s_dim+1, 2*HIDDEN] fused [w_pi1 | w_v1 ; b_pi1 | b_v1]
    # w2_ref: [2*HIDDEN, OUT_PAD] block-diagonal [pi2 ; v2] (zero-padded)
    # b2_ref: [1, OUT_PAD]        [b_pi2 | b_v2 | 0...]
    # out_ref:[bm, OUT_PAD]       [logits | value | junk...]
    h = jnp.tanh(
        jnp.dot(x_ref[...], w1_ref[...], preferred_element_type=jnp.float32)
    )
    out_ref[...] = (
        jnp.dot(h, w2_ref[...], preferred_element_type=jnp.float32)
        + b2_ref[...]
    ).astype(out_ref.dtype)


def pack_params(params, a_dim):
    """Pack the 8 per-layer tensors into 3 kernel-friendly slabs (do once)."""
    hidden = params["w_pi1"].shape[1]
    assert a_dim + 1 <= OUT_PAD

    # Layer 1: concat the two heads along the output axis, append bias row.
    w1 = jnp.concatenate([params["w_pi1"], params["w_v1"]], axis=1)   # [s, 2H]
    b1 = jnp.concatenate([params["b_pi1"], params["b_v1"]], axis=1)   # [1, 2H]
    w1_slab = jnp.concatenate([w1, b1], axis=0)                       # [s+1, 2H]

    # Layer 2: block-diagonal, zero-padded to a lane-dense output width.
    w2_slab = jnp.zeros((2 * hidden, OUT_PAD), jnp.float32)
    w2_slab = w2_slab.at[:hidden, :a_dim].set(params["w_pi2"])
    w2_slab = w2_slab.at[hidden:, a_dim:a_dim + 1].set(params["w_v2"])

    b2_slab = jnp.zeros((1, OUT_PAD), jnp.float32)
    b2_slab = b2_slab.at[:, :a_dim].set(params["b_pi2"])
    b2_slab = b2_slab.at[:, a_dim:a_dim + 1].set(params["b_v2"])

    return w1_slab, w2_slab, b2_slab


def a3c_net_forward(x, packed, a_dim, *, block_b=512):
    """x: [B, s_dim] f32. packed: output of pack_params.
    Returns (logits [B, a_dim], values [B, 1])."""
    w1_slab, w2_slab, b2_slab = packed
    B, s_dim = x.shape

    # Pick batch tile: multiple of 8 sublanes, capped at block_b.
    bp = ((B + 7) // 8) * 8
    bm = min(block_b, bp)
    bp = pl.cdiv(bp, bm) * bm

    # One fused pad: appends the ones column (folds layer-1 bias into the
    # matmul) and pads the batch to bp rows. Padded rows become all-ones;
    # they compute garbage and are sliced off below.
    x_aug = jnp.pad(
        x.astype(jnp.float32), ((0, bp - B), (0, 1)), constant_values=1.0
    )

    out = pl.pallas_call(
        _a3c_net_kernel,
        out_shape=jax.ShapeDtypeStruct((bp, OUT_PAD), jnp.float32),
        grid=(bp // bm,),
        in_specs=[
            pl.BlockSpec((bm, s_dim + 1), lambda i: (i, 0)),
            pl.BlockSpec(w1_slab.shape, lambda i: (0, 0)),
            pl.BlockSpec(w2_slab.shape, lambda i: (0, 0)),
            pl.BlockSpec(b2_slab.shape, lambda i: (0, 0)),
        ],
        out_specs=pl.BlockSpec((bm, OUT_PAD), lambda i: (i, 0)),
        compiler_params=pltpu.CompilerParams(
            dimension_semantics=("parallel",)
        ),
    )(x_aug, w1_slab, w2_slab, b2_slab)

    logits = out[:B, :a_dim]
    values = out[:B, a_dim:a_dim + 1]
    return logits, values


def init_params(key, s_dim, a_dim, hidden=HIDDEN):
    """Deterministic init mimicking nn.Linear default (uniform +-1/sqrt(fan_in)).
    Weights stored as [in, out] (transposed vs. PyTorch's [out, in])."""
    ks = jax.random.split(key, 8)

    def linear(kw, kb, fan_in, fan_out):
        bound = 1.0 / jnp.sqrt(fan_in)
        w = jax.random.uniform(kw, (fan_in, fan_out), jnp.float32, -bound, bound)
        b = jax.random.uniform(kb, (1, fan_out), jnp.float32, -bound, bound)
        return w, b

    w_pi1, b_pi1 = linear(ks[0], ks[1], s_dim, hidden)
    w_pi2, b_pi2 = linear(ks[2], ks[3], hidden, a_dim)
    w_v1, b_v1 = linear(ks[4], ks[5], s_dim, hidden)
    w_v2, b_v2 = linear(ks[6], ks[7], hidden, 1)
    return dict(w_pi1=w_pi1, b_pi1=b_pi1, w_pi2=w_pi2, b_pi2=b_pi2,
                w_v1=w_v1, b_v1=b_v1, w_v2=w_v2, b_v2=b_v2)


def reference_forward(x, p):
    h_pi = jnp.tanh(x @ p["w_pi1"] + p["b_pi1"])
    logits = h_pi @ p["w_pi2"] + p["b_pi2"]
    h_v = jnp.tanh(x @ p["w_v1"] + p["b_v1"])
    values = h_v @ p["w_v2"] + p["b_v2"]
    return logits, values


if __name__ == "__main__":
    key = jax.random.PRNGKey(0)
    k_x, k_p = jax.random.split(key)

    B, s_dim, a_dim = 4, 8, 4  # small shapes consistent with Net(s_dim, a_dim)
    x = jax.random.normal(k_x, (B, s_dim), jnp.float32)
    params = init_params(k_p, s_dim, a_dim)
    packed = pack_params(params, a_dim)

    logits, values = a3c_net_forward(x, packed, a_dim)
    jax.block_until_ready((logits, values))

    # sanity check against pure-JAX reference on the unpacked params
    ref_logits, ref_values = reference_forward(x, params)
    assert logits.shape == (B, a_dim)
    assert values.shape == (B, 1)
    assert jnp.allclose(logits, ref_logits, atol=1e-5, rtol=1e-5)
    assert jnp.allclose(values, ref_values, atol=1e-5, rtol=1e-5)

    # also exercise a multi-tile batch to cover the grid path
    B2 = 1030
    x2 = jax.random.normal(k_x, (B2, s_dim), jnp.float32)
    l2, v2 = a3c_net_forward(x2, packed, a_dim)
    jax.block_until_ready((l2, v2))
    rl2, rv2 = reference_forward(x2, params)
    assert jnp.allclose(l2, rl2, atol=1e-5, rtol=1e-5)
    assert jnp.allclose(v2, rv2, atol=1e-5, rtol=1e-5)

    print("KERNEL_OK")
</pallas_src>

<mosaic_0001>
module attributes {stable_mosaic.version = 11 : i64} {
  func.func @_a3c_net_kernel(%arg0: i32, %arg1: memref<8x9xf32, #tpu.memory_space<vmem>>, %arg2: memref<9x256xf32, #tpu.memory_space<vmem>>, %arg3: memref<256x128xf32, #tpu.memory_space<vmem>>, %arg4: memref<1x128xf32, #tpu.memory_space<vmem>>, %arg5: memref<8x128xf32, #tpu.memory_space<vmem>>) attributes {dimension_semantics = [#tpu.dimension_semantics<parallel>], iteration_bounds = array<i64: 1>, scalar_prefetch = 0 : i64, scratch_operands = 0 : i64, tpu.core_type = #tpu.core_type<tc>, window_params = [{transform_indices = @transform_0, window_bounds = array<i64: 8, 9>}, {pipeline_mode = #tpu.pipeline_mode<synchronous>, transform_indices = @transform_1, window_bounds = array<i64: 9, 256>}, {pipeline_mode = #tpu.pipeline_mode<synchronous>, transform_indices = @transform_2, window_bounds = array<i64: 256, 128>}, {pipeline_mode = #tpu.pipeline_mode<synchronous>, transform_indices = @transform_3, window_bounds = array<i64: 1, 128>}, {transform_indices = @transform_4, window_bounds = array<i64: 8, 128>}]} {
    %c0 = arith.constant 0 : index
    %c0_0 = arith.constant 0 : index
    %0 = vector.load %arg1[%c0, %c0_0] : memref<8x9xf32, #tpu.memory_space<vmem>>, vector<8x9xf32>
    %c0_1 = arith.constant 0 : index
    %c0_2 = arith.constant 0 : index
    %1 = vector.load %arg2[%c0_1, %c0_2] : memref<9x256xf32, #tpu.memory_space<vmem>>, vector<9x256xf32>
    %cst = arith.constant dense<0.000000e+00> : vector<8x256xf32>
    %2 = tpu.matmul %0, %1, %cst {dimension_numbers = #tpu.dot_dimension_numbers<[1], [0], [0], [1], [0, 0, 1, 1], [], []>} : vector<8x9xf32>, vector<9x256xf32>, vector<8x256xf32> -> vector<8x256xf32>
    %3 = math.tanh %2 : vector<8x256xf32>
    %c0_3 = arith.constant 0 : index
    %c0_4 = arith.constant 0 : index
    %4 = vector.load %arg3[%c0_3, %c0_4] : memref<256x128xf32, #tpu.memory_space<vmem>>, vector<256x128xf32>
    %cst_5 = arith.constant dense<0.000000e+00> : vector<8x128xf32>
    %5 = tpu.matmul %3, %4, %cst_5 {dimension_numbers = #tpu.dot_dimension_numbers<[1], [0], [0], [1], [0, 0, 1, 1], [], []>} : vector<8x256xf32>, vector<256x128xf32>, vector<8x128xf32> -> vector<8x128xf32>
    %c0_6 = arith.constant 0 : index
    %c0_7 = arith.constant 0 : index
    %6 = vector.load %arg4[%c0_6, %c0_7] : memref<1x128xf32, #tpu.memory_space<vmem>>, vector<1x128xf32>
    %7 = vector.broadcast %6 : vector<1x128xf32> to vector<8x128xf32>
    %8 = arith.addf %5, %7 : vector<8x128xf32>
    %c0_8 = arith.constant 0 : index
    %c0_9 = arith.constant 0 : index
    %9 = vector.load %arg5[%c0_8, %c0_9] : memref<8x128xf32, #tpu.memory_space<vmem>>, vector<8x128xf32>
    tpu.vector_store %arg5[%c0_8, %c0_9], %8 {strides = array<i32>} : memref<8x128xf32, #tpu.memory_space<vmem>>, vector<8x128xf32>,
    return
  }
  func.func @transform_0(%arg0: i32) -> (i32, i32) {
    %c0_i32 = arith.constant 0 : i32
    %c0_i32_0 = arith.constant 0 : i32
    return %arg0, %c0_i32 : i32, i32
  }
  func.func @transform_1(%arg0: i32) -> (i32, i32) {
    %c0_i32 = arith.constant 0 : i32
    %c0_i32_0 = arith.constant 0 : i32
    %c0_i32_1 = arith.constant 0 : i32
    return %c0_i32, %c0_i32_0 : i32, i32
  }
  func.func @transform_2(%arg0: i32) -> (i32, i32) {
    %c0_i32 = arith.constant 0 : i32
    %c0_i32_0 = arith.constant 0 : i32
    %c0_i32_1 = arith.constant 0 : i32
    return %c0_i32, %c0_i32_0 : i32, i32
  }
  func.func @transform_3(%arg0: i32) -> (i32, i32) {
    %c0_i32 = arith.constant 0 : i32
    %c0_i32_0 = arith.constant 0 : i32
    %c0_i32_1 = arith.constant 0 : i32
    return %c0_i32, %c0_i32_0 : i32, i32
  }
  func.func @transform_4(%arg0: i32) -> (i32, i32) {
    %c0_i32 = arith.constant 0 : i32
    %c0_i32_0 = arith.constant 0 : i32
    return %arg0, %c0_i32 : i32, i32
  }
}

</mosaic_0001>

<llo_original>
// kernel: tpu_custom_call.1
$region0: #{tpu_custom_call.1}
  #allocation0 [shape = 'u32[]', space=smem, size = 0x4, offset = 0x4, fixed_abs, tag = 'smem constant byte address 0x4 - core index']
  #allocation1 [shape = 'u32[72,128]{1,0:T(1,128)}', space=vmem, size = 0x9000, scoped, tag = 'internal scratch']
  %s0 = inlined_call_operand.hbm [shape: f32[8,9], index: 0, kind: input, shape index: {}]
  %s1 = inlined_call_operand.hbm [shape: f32[9,256], index: 1, kind: input, shape index: {}]
  %s2 = inlined_call_operand.hbm [shape: f32[256,128], index: 2, kind: input, shape index: {}]
  %s3 = inlined_call_operand.vmem [shape: f32[1,128], index: 3, kind: input, shape index: {}]
  %s4 = inlined_call_operand.hbm [shape: f32[8,128], index: 4, kind: output, shape index: {}]
  %s5 = sld [smem:[#allocation0]]
  $region38: #{tpu_custom_call.1} parent=0
    _
  %s7 = ssub.s32 1, %s5
  %s8 = scalar_select 0, %s7, %s5
  $region1: #{tpu_custom_call.1} parent=0
    #allocation2 [shape = 'u8[4096]{0}', space=vmem, size = 0x1000, scoped, tag = 'input window, operand 0, single buffered']
    #allocation3 [shape = 's32[1]{0}', space=sflag, size = 0x4, scoped, tag = 'scoped memory for tpu_custom_call.1']
    #allocation4 [shape = 's32[1]{0}', space=sflag, size = 0x4, scoped, tag = 'scoped memory for tpu_custom_call.1']
    #allocation5 [shape = 'u8[16384]{0}', space=vmem, size = 0x4000, scoped, tag = 'input window, operand 1, single buffered']
    #allocation6 [shape = 's32[1]{0}', space=sflag, size = 0x4, scoped, tag = 'scoped memory for tpu_custom_call.1']
    #allocation7 [shape = 'u8[131072]{0}', space=vmem, size = 0x20000, scoped, tag = 'input window, operand 2, single buffered']
    #allocation8 [shape = 'u8[4096]{0}', space=vmem, size = 0x1000, scoped, tag = 'output window, operand 0, single buffered']
    %9 = vsyncpa [#allocation3], 0
    %10 = vsyncpa [#allocation6], 0
    %11 = vsyncpa [#allocation4], 0
    // Predicated region
    $region2: #{tpu_custom_call.1} parent=1 // pred_check
      _
    $region3: #{tpu_custom_call.1} parent=1 // pred_check_branch
      %13 = sbr.rel (0) target = $region5
    $region4: #{tpu_custom_call.1} parent=1 // pred_region
      %15 = vsyncadd [#allocation3], 0
      %s17 = sshll.u32 %s0, 4
      %s18 = int_to_ptr.hbm [resolvable:$true] %s17
      %s19 = sshll.u32 [#allocation2], 4
      %s20 = int_to_ptr.vmem [resolvable:$true] %s19
      %22 = dma.hbm_to_vmem [thread:$0]  %s18, 128, %s20, [#allocation3]
    $region5: #{tpu_custom_call.1} parent=1 // pred_fallthru
      _
    // Predicated region
    $region6: #{tpu_custom_call.1} parent=1 // pred_check
      _
    $region7: #{tpu_custom_call.1} parent=1 // pred_check_branch
      %24 = sbr.rel (0) target = $region9
    $region8: #{tpu_custom_call.1} parent=1 // pred_region
      %26 = vsyncadd [#allocation6], 0
      %s27 = sshll.u32 %s1, 4
      %s28 = int_to_ptr.hbm [resolvable:$true] %s27
      %s29 = sshll.u32 [#allocation5], 4
      %s30 = int_to_ptr.vmem [resolvable:$true] %s29
      %35 = dma.hbm_to_vmem [thread:$0]  %s28, 512, %s30, [#allocation6], 256, 256, 16
    $region9: #{tpu_custom_call.1} parent=1 // pred_fallthru
      _
    // Predicated region
    $region10: #{tpu_custom_call.1} parent=1 // pred_check
      _
    $region11: #{tpu_custom_call.1} parent=1 // pred_check_branch
      %37 = sbr.rel (0) target = $region13
    $region12: #{tpu_custom_call.1} parent=1 // pred_region
      %39 = vsyncadd [#allocation6], 0
      %s40 = sshll.u32 %s2, 4
      %s41 = int_to_ptr.hbm [resolvable:$true] %s40
      %s42 = sshll.u32 [#allocation7], 4
      %s43 = int_to_ptr.vmem [resolvable:$true] %s42
      %48 = dma.hbm_to_vmem [thread:$0]  %s41, 4096, %s43, [#allocation6], 128, 128, 8
    $region13: #{tpu_custom_call.1} parent=1 // pred_fallthru
      _
    // Predicated region
    $region14: #{tpu_custom_call.1} parent=1 // pred_check
      _
    $region15: #{tpu_custom_call.1} parent=1 // pred_check_branch
      %50 = sbr.rel (0) target = $region17
    $region16: #{tpu_custom_call.1} parent=1 // pred_region
      _
    $region17: #{tpu_custom_call.1} parent=1 // pred_fallthru
      _
    // Predicated region
    $region18: #{tpu_custom_call.1} parent=1 // pred_check
      _
    $region19: #{tpu_custom_call.1} parent=1 // pred_check_branch
      %52 = sbr.rel (0) target = $region21
    $region20: #{tpu_custom_call.1} parent=1 // pred_region
      %54 = dma.done [#allocation3], 128
    $region21: #{tpu_custom_call.1} parent=1 // pred_fallthru
      _
    // Predicated region
    $region22: #{tpu_custom_call.1} parent=1 // pred_check
      _
    $region23: #{tpu_custom_call.1} parent=1 // pred_check_branch
      %56 = sbr.rel (0) target = $region25
    $region24: #{tpu_custom_call.1} parent=1 // pred_region
      %58 = dma.done [#allocation6], 512
    $region25: #{tpu_custom_call.1} parent=1 // pred_fallthru
      _
    // Predicated region
    $region26: #{tpu_custom_call.1} parent=1 // pred_check
      _
    $region27: #{tpu_custom_call.1} parent=1 // pred_check_branch
      %60 = sbr.rel (0) target = $region29
    $region28: #{tpu_custom_call.1} parent=1 // pred_region
      %62 = dma.done [#allocation6], 4096
    $region29: #{tpu_custom_call.1} parent=1 // pred_fallthru
      _
    %v63 = vld [vmem:[#allocation2] sm:$0xff]
    %v64 = vld [vmem:[#allocation5] sm:$0xff]
    %v65 = vld [vmem:[#allocation5 + $0x8] sm:$0xff]
    %v66 = vld [vmem:[#allocation5 + $0x10] sm:$0x1]
    %v67 = vld [vmem:[#allocation5 + $0x18] sm:$0x1]
    %vm68 = vcmask 72704
    %v70 = vsel %vm68, %v63, 0
    %vm72 = vcmask 1040384
    %v74 = vsel %vm72, %v66, 0
    %v77 = vsel %vm72, %v67, 0
    %79 = vmatpush.msra.mxu0 0.0
    %80 = vmatpush.msra.mxu0 0.0
    %81 = vmatpush.msra.mxu0 0.0
    %82 = vmatpush.msra.mxu0 0.0
    %83 = vmatpush.msra.mxu0 0.0
    %84 = vmatpush.msra.mxu0 0.0
    %85 = vmatpush.msra.mxu0 0.0
    %86 = vmatpush.msra.mxu0 0.0
    %87 = vmatpush.msra.mxu0 0.0
    %88 = vmatpush.msra.mxu0 0.0
    %89 = vmatpush.msra.mxu0 0.0
    %90 = vmatpush.msra.mxu0 0.0
    %91 = vmatpush.msra.mxu0 0.0
    %92 = vmatpush.msra.mxu0 0.0
    %93 = vmatpush.msra.mxu0 %v74
    %94 = vmatpush.msra.mxu0 %v64
    %95 = vmatmul.f32.gmra.mxu0 %v70
    %v96 = vpop.f32.mrf.mxu0
    %v97 = vadd.f32 0.0, %v96
    %98 = vdwg.mxu0
    %99 = vmatpush.msra.mxu0 0.0
    %100 = vmatpush.msra.mxu0 0.0
    %101 = vmatpush.msra.mxu0 0.0
    %102 = vmatpush.msra.mxu0 0.0
    %103 = vmatpush.msra.mxu0 0.0
    %104 = vmatpush.msra.mxu0 0.0
    %105 = vmatpush.msra.mxu0 0.0
    %106 = vmatpush.msra.mxu0 0.0
    %107 = vmatpush.msra.mxu0 0.0
    %108 = vmatpush.msra.mxu0 0.0
    %109 = vmatpush.msra.mxu0 0.0
    %110 = vmatpush.msra.mxu0 0.0
    %111 = vmatpush.msra.mxu0 0.0
    %112 = vmatpush.msra.mxu0 0.0
    %113 = vmatpush.msra.mxu0 %v77
    %114 = vmatpush.msra.mxu0 %v65
    %115 = vmatmul.f32.gmra.mxu0 %v70
    %v116 = vpop.f32.mrf.mxu0
    %v117 = vadd.f32 0.0, %v116
    %118 = vdwg.mxu0
    %v119 = vtanh.pop %v97
    %v120 = vtanh.pop %v117
    %v121 = vld [vmem:[#allocation7] sm:$0xff]
    %v122 = vld [vmem:[#allocation7 + $0x8] sm:$0xff]
    %v123 = vld [vmem:[#allocation7 + $0x10] sm:$0xff]
    %v124 = vld [vmem:[#allocation7 + $0x18] sm:$0xff]
    %v125 = vld [vmem:[#allocation7 + $0x20] sm:$0xff]
    %v126 = vld [vmem:[#allocation7 + $0x28] sm:$0xff]
    %v127 = vld [vmem:[#allocation7 + $0x30] sm:$0xff]
    %v128 = vld [vmem:[#allocation7 + $0x38] sm:$0xff]
    %v129 = vld [vmem:[#allocation7 + $0x40] sm:$0xff]
    %v130 = vld [vmem:[#allocation7 + $0x48] sm:$0xff]
    %v131 = vld [vmem:[#allocation7 + $0x50] sm:$0xff]
    %v132 = vld [vmem:[#allocation7 + $0x58] sm:$0xff]
    %v133 = vld [vmem:[#allocation7 + $0x60] sm:$0xff]
    %v134 = vld [vmem:[#allocation7 + $0x68] sm:$0xff]
    %v135 = vld [vmem:[#allocation7 + $0x70] sm:$0xff]
    %v136 = vld [vmem:[#allocation7 + $0x78] sm:$0xff]
    %v137 = vld [vmem:[#allocation7 + $0x80] sm:$0xff]
    %v138 = vld [vmem:[#allocation7 + $0x88] sm:$0xff]
    %v139 = vld [vmem:[#allocation7 + $0x90] sm:$0xff]
    %v140 = vld [vmem:[#allocation7 + $0x98] sm:$0xff]
    %v141 = vld [vmem:[#allocation7 + $0xa0] sm:$0xff]
    %v142 = vld [vmem:[#allocation7 + $0xa8] sm:$0xff]
    %v143 = vld [vmem:[#allocation7 + $0xb0] sm:$0xff]
    %v144 = vld [vmem:[#allocation7 + $0xb8] sm:$0xff]
    %v145 = vld [vmem:[#allocation7 + $0xc0] sm:$0xff]
    %v146 = vld [vmem:[#allocation7 + $0xc8] sm:$0xff]
    %v147 = vld [vmem:[#allocation7 + $0xd0] sm:$0xff]
    %v148 = vld [vmem:[#allocation7 + $0xd8] sm:$0xff]
    %v149 = vld [vmem:[#allocation7 + $0xe0] sm:$0xff]
    %v150 = vld [vmem:[#allocation7 + $0xe8] sm:$0xff]
    %v151 = vld [vmem:[#allocation7 + $0xf0] sm:$0xff]
    %v152 = vld [vmem:[#allocation7 + $0xf8] sm:$0xff]
    %v153 = vld [vmem:[%s3] sm:$0x1]
    %v155 = vperm.slane %v153, 0
    %157 = vmatpush.msra.mxu0 %v136
    %158 = vmatpush.msra.mxu0 %v135
    %159 = vmatpush.msra.mxu0 %v134
    %160 = vmatpush.msra.mxu0 %v133
    %161 = vmatpush.msra.mxu0 %v132
    %162 = vmatpush.msra.mxu0 %v131
    %163 = vmatpush.msra.mxu0 %v130
    %164 = vmatpush.msra.mxu0 %v129
    %165 = vmatpush.msra.mxu0 %v128
    %166 = vmatpush.msra.mxu0 %v127
    %167 = vmatpush.msra.mxu0 %v126
    %168 = vmatpush.msra.mxu0 %v125
    %169 = vmatpush.msra.mxu0 %v124
    %170 = vmatpush.msra.mxu0 %v123
    %171 = vmatpush.msra.mxu0 %v122
    %172 = vmatpush.msra.mxu0 %v121
    %173 = vmatmul.f32.gmra.mxu0 %v119
    %v174 = vpop.f32.mrf.mxu0
    %v175 = vadd.f32 %v155, %v174
    %176 = vdwg.mxu0
    %177 = vmatpush.msra.mxu0 %v152
    %178 = vmatpush.msra.mxu0 %v151
    %179 = vmatpush.msra.mxu0 %v150
    %180 = vmatpush.msra.mxu0 %v149
    %181 = vmatpush.msra.mxu0 %v148
    %182 = vmatpush.msra.mxu0 %v147
    %183 = vmatpush.msra.mxu0 %v146
    %184 = vmatpush.msra.mxu0 %v145
    %185 = vmatpush.msra.mxu0 %v144
    %186 = vmatpush.msra.mxu0 %v143
    %187 = vmatpush.msra.mxu0 %v142
    %188 = vmatpush.msra.mxu0 %v141
    %189 = vmatpush.msra.mxu0 %v140
    %190 = vmatpush.msra.mxu0 %v139
    %191 = vmatpush.msra.mxu0 %v138
    %192 = vmatpush.msra.mxu0 %v137
    %193 = vmatmul.f32.gmra.mxu0 %v120
    %v194 = vpop.f32.mrf.mxu0
    %v195 = vadd.f32 %v175, %v194
    %196 = vdwg.mxu0
    %197 = vst [vmem:[#allocation8] sm:$0xff] %v195
    // Predicated region
    $region30: #{tpu_custom_call.1} parent=1 // pred_check
      _
    $region31: #{tpu_custom_call.1} parent=1 // pred_check_branch
      %199 = sbr.rel (0) target = $region33
    $region32: #{tpu_custom_call.1} parent=1 // pred_region
      %201 = vsyncadd [#allocation4], 0
      %s203 = sshll.u32 [#allocation8], 4
      %s204 = int_to_ptr.vmem [resolvable:$true] %s203
      %s205 = sshll.u32 %s4, 4
      %s206 = int_to_ptr.hbm [resolvable:$true] %s205
      %208 = dma.vmem_to_hbm [thread:$0]  %s204, 128, %s206, [#allocation4]
    $region33: #{tpu_custom_call.1} parent=1 // pred_fallthru
      _
    // Predicated region
    $region34: #{tpu_custom_call.1} parent=1 // pred_check
      _
    $region35: #{tpu_custom_call.1} parent=1 // pred_check_branch
      %210 = sbr.rel (0) target = $region37
    $region36: #{tpu_custom_call.1} parent=1 // pred_region
      %212 = dma.done [#allocation4], 128
    $region37: #{tpu_custom_call.1} parent=1 // pred_fallthru
      _
    %213 = vsyncpa [#allocation3], 1
    %214 = vsyncpa [#allocation6], 1
    %215 = vsyncpa [#allocation4], 1

</llo_original>
